<compile_context>
chip_gen: v7x
topology: tpu7x:2x2x1
jax: 0.10.0
libtpu: 0.0.40
codegen_flags: <defaults>
</compile_context>

<pallas_src>
import functools
import math

import jax
import jax.numpy as jnp
from jax import lax
from jax.experimental import pallas as pl
from jax.experimental.pallas import tpu as pltpu


# Below this batch size a fused XLA dot+bias beats the fixed pallas_call cost.
_MICRO_BATCH_THRESHOLD = 64

# Contract the feature axis of both operands: (A, F) x (bb, F) -> (A, bb).
_DN = (((1,), (1,)), ((), ()))


def _controller_kernel(z_ref, h_ref, wz_ref, wh_ref, b_ref, o_ref):
    # Two MXU pushes (latent part + recurrent part), f32 accumulation.
    # RHS is "transposed" (batch, feature) -> lowered as the standard q@k.T form.
    acc = lax.dot_general(
        wz_ref[...], z_ref[...].astype(wz_ref.dtype), _DN,
        preferred_element_type=jnp.float32)
    acc = acc + lax.dot_general(
        wh_ref[...], h_ref[...].astype(wh_ref.dtype), _DN,
        preferred_element_type=jnp.float32)
    # f32 epilogue (bias add + cast) - safe on v5e (no bf16 VPU datapath).
    o_ref[...] = (acc + b_ref[...].astype(jnp.float32)).astype(o_ref.dtype)


def prepare_controller_params(weight, bias, latents, compute_dtype=jnp.float32):
    """One-time parameter prep (call at load time, NOT per forward step).

    weight: (actions, latents + recurrents)  -- torch nn.Linear layout
    bias:   (actions,)
    Returns:
      w_z:   (actions, latents)    in compute_dtype
      w_h:   (actions, recurrents) in compute_dtype
      b_col: (actions, 1) float32  (epilogue stays f32)
    """
    w = jnp.asarray(weight)
    w_z = w[:, :latents].astype(compute_dtype)
    w_h = w[:, latents:].astype(compute_dtype)
    b_col = jnp.asarray(bias).reshape(-1, 1).astype(jnp.float32)
    return w_z, w_h, b_col


def _forward_t_impl(z, h, w_z, w_h, b_col, block_b):
    """out^T = W_z @ z^T + W_h @ h^T + b   with shape (actions, B)."""
    B, L = z.shape
    _, R = h.shape
    A = w_z.shape[0]
    F = L + R

    if B < _MICRO_BATCH_THRESHOLD:
        # Micro-batch regime (e.g. B=4 per env step): skip the custom call.
        return (lax.dot_general(w_z, z.astype(w_z.dtype), _DN,
                                preferred_element_type=jnp.float32)
                + lax.dot_general(w_h, h.astype(w_h.dtype), _DN,
                                  preferred_element_type=jnp.float32)
                + b_col)

    bb = min(block_b, B)        # single full-extent block for small/medium B
    grid = (pl.cdiv(B, bb),)

    w_itemsize = jnp.dtype(w_z.dtype).itemsize
    cost = pl.CostEstimate(
        flops=2 * B * F * A,
        transcendentals=0,
        bytes_accessed=(B * F) * z.dtype.itemsize
        + (F * A) * w_itemsize + A * 4 + A * B * 4,
    )

    return pl.pallas_call(
        _controller_kernel,
        out_shape=jax.ShapeDtypeStruct((A, B), jnp.float32),
        grid=grid,
        in_specs=[
            pl.BlockSpec((bb, L), lambda i: (i, 0)),   # z: tiled over batch rows
            pl.BlockSpec((bb, R), lambda i: (i, 0)),   # h: tiled over batch rows
            pl.BlockSpec((A, L), lambda i: (0, 0)),    # w_z: VMEM-resident
            pl.BlockSpec((A, R), lambda i: (0, 0)),    # w_h: VMEM-resident
            pl.BlockSpec((A, 1), lambda i: (0, 0)),    # bias column: VMEM-resident
        ],
        # Lane-dense output: batch on lanes -> unmasked full-width stores.
        out_specs=pl.BlockSpec((A, bb), lambda i: (0, i)),
        compiler_params=pltpu.CompilerParams(
            dimension_semantics=("parallel",),   # shards batch blocks on v7x (2 TCs)
        ),
        cost_estimate=cost,
    )(z, h, w_z, w_h, b_col)


@functools.partial(jax.jit, static_argnames=("block_b",))
def controller_forward_t(z, h, w_z, w_h, b_col, *, block_b=1024):
    """Native lane-dense layout: returns (actions, B). Prefer this if the
    consumer can accept transposed actions (skips the final transpose)."""
    return _forward_t_impl(z, h, w_z, w_h, b_col, block_b)


@functools.partial(jax.jit, static_argnames=("block_b",))
def controller_forward(z, h, w_z, w_h, b_col, *, block_b=1024):
    """Torch-compatible layout: out = cat([z, h], dim=1) @ W^T + b, shape (B, actions)."""
    return _forward_t_impl(z, h, w_z, w_h, b_col, block_b).T


if __name__ == "__main__":
    LATENTS, RECURRENTS, ACTIONS = 32, 64, 8
    B = 256  # batched environments / timesteps

    key = jax.random.PRNGKey(0)
    kz, kh, kw, kb = jax.random.split(key, 4)

    # Generate 300 rows so we can also test a partial last block; main test uses 256.
    z_all = jax.random.normal(kz, (300, LATENTS), dtype=jnp.float32)
    h_all = jax.random.normal(kh, (300, RECURRENTS), dtype=jnp.float32)
    z, h = z_all[:B], h_all[:B]

    # Deterministic synthetic parameters (torch nn.Linear layout: (out, in), (out,))
    fan_in = LATENTS + RECURRENTS
    bound = 1.0 / math.sqrt(fan_in)
    weight = jax.random.uniform(kw, (ACTIONS, fan_in), dtype=jnp.float32,
                                minval=-bound, maxval=bound)
    bias = jax.random.uniform(kb, (ACTIONS,), dtype=jnp.float32,
                              minval=-bound, maxval=bound)

    # One-time parameter prep (hoisted out of the per-step path).
    wz_f32, wh_f32, b_col = prepare_controller_params(
        weight, bias, LATENTS, compute_dtype=jnp.float32)
    wz_bf16, wh_bf16, _ = prepare_controller_params(
        weight, bias, LATENTS, compute_dtype=jnp.bfloat16)

    # Reference (pure JAX) for the fused cat + linear.
    ref_all = jnp.concatenate([z_all, h_all], axis=1) @ weight.T + bias
    ref = ref_all[:B]

    # f32 Pallas path, torch-compatible (B, A) output.
    out = jax.block_until_ready(controller_forward(z, h, wz_f32, wh_f32, b_col))
    assert out.shape == (B, ACTIONS)
    assert jnp.allclose(out, ref, atol=1e-5, rtol=1e-5)

    # Native lane-dense (A, B) output.
    out_t = jax.block_until_ready(controller_forward_t(z, h, wz_f32, wh_f32, b_col))
    assert out_t.shape == (ACTIONS, B)
    assert jnp.allclose(out_t, ref.T, atol=1e-5, rtol=1e-5)

    # bf16 weight path: bf16 MXU operands, f32 accumulation + epilogue.
    out_bf16 = jax.block_until_ready(controller_forward(z, h, wz_bf16, wh_bf16, b_col))
    assert jnp.allclose(out_bf16, ref, atol=5e-2, rtol=5e-2)

    # Partial last block (B=300, block_b=128 -> 3 grid steps, masked tail).
    out_300 = jax.block_until_ready(
        controller_forward(z_all, h_all, wz_f32, wh_f32, b_col, block_b=128))
    assert out_300.shape == (300, ACTIONS)
    assert jnp.allclose(out_300, ref_all, atol=1e-5, rtol=1e-5)

    # Micro-batch regime (B=4): pure-jnp fallback below the Pallas threshold.
    out_small = jax.block_until_ready(
        controller_forward(z[:4], h[:4], wz_f32, wh_f32, b_col))
    assert jnp.allclose(out_small, ref[:4], atol=1e-5, rtol=1e-5)

    print("KERNEL_OK")
</pallas_src>

<mosaic_0001>
module attributes {stable_mosaic.version = 11 : i64} {
  func.func @_controller_kernel(%arg0: i32, %arg1: memref<256x32xf32, #tpu.memory_space<vmem>>, %arg2: memref<256x64xf32, #tpu.memory_space<vmem>>, %arg3: memref<8x32xf32, #tpu.memory_space<vmem>>, %arg4: memref<8x64xf32, #tpu.memory_space<vmem>>, %arg5: memref<8x1xf32, #tpu.memory_space<vmem>>, %arg6: memref<8x256xf32, #tpu.memory_space<vmem>>) attributes {dimension_semantics = [#tpu.dimension_semantics<parallel>], iteration_bounds = array<i64: 1>, scalar_prefetch = 0 : i64, scratch_operands = 0 : i64, tpu.core_type = #tpu.core_type<tc>, window_params = [{transform_indices = @transform_0, window_bounds = array<i64: 256, 32>}, {transform_indices = @transform_1, window_bounds = array<i64: 256, 64>}, {pipeline_mode = #tpu.pipeline_mode<synchronous>, transform_indices = @transform_2, window_bounds = array<i64: 8, 32>}, {pipeline_mode = #tpu.pipeline_mode<synchronous>, transform_indices = @transform_3, window_bounds = array<i64: 8, 64>}, {pipeline_mode = #tpu.pipeline_mode<synchronous>, transform_indices = @transform_4, window_bounds = array<i64: 8, 1>}, {transform_indices = @transform_5, window_bounds = array<i64: 8, 256>}]} {
    %c0 = arith.constant 0 : index
    %c0_0 = arith.constant 0 : index
    %0 = vector.load %arg3[%c0, %c0_0] : memref<8x32xf32, #tpu.memory_space<vmem>>, vector<8x32xf32>
    %c0_1 = arith.constant 0 : index
    %c0_2 = arith.constant 0 : index
    %1 = vector.load %arg1[%c0_1, %c0_2] : memref<256x32xf32, #tpu.memory_space<vmem>>, vector<256x32xf32>
    %cst = arith.constant dense<0.000000e+00> : vector<8x256xf32>
    %2 = tpu.matmul %0, %1, %cst {dimension_numbers = #tpu.dot_dimension_numbers<[1], [1], [0], [0], [0, 0, 1, 0], [], []>} : vector<8x32xf32>, vector<256x32xf32>, vector<8x256xf32> -> vector<8x256xf32>
    %c0_3 = arith.constant 0 : index
    %c0_4 = arith.constant 0 : index
    %3 = vector.load %arg4[%c0_3, %c0_4] : memref<8x64xf32, #tpu.memory_space<vmem>>, vector<8x64xf32>
    %c0_5 = arith.constant 0 : index
    %c0_6 = arith.constant 0 : index
    %4 = vector.load %arg2[%c0_5, %c0_6] : memref<256x64xf32, #tpu.memory_space<vmem>>, vector<256x64xf32>
    %cst_7 = arith.constant dense<0.000000e+00> : vector<8x256xf32>
    %5 = tpu.matmul %3, %4, %cst_7 {dimension_numbers = #tpu.dot_dimension_numbers<[1], [1], [0], [0], [0, 0, 1, 0], [], []>} : vector<8x64xf32>, vector<256x64xf32>, vector<8x256xf32> -> vector<8x256xf32>
    %6 = arith.addf %2, %5 : vector<8x256xf32>
    %c0_8 = arith.constant 0 : index
    %c0_9 = arith.constant 0 : index
    %7 = vector.load %arg5[%c0_8, %c0_9] : memref<8x1xf32, #tpu.memory_space<vmem>>, vector<8x1xf32>
    %8 = vector.broadcast %7 : vector<8x1xf32> to vector<8x256xf32>
    %9 = arith.addf %6, %8 : vector<8x256xf32>
    %c0_10 = arith.constant 0 : index
    %c0_11 = arith.constant 0 : index
    %10 = vector.load %arg6[%c0_10, %c0_11] : memref<8x256xf32, #tpu.memory_space<vmem>>, vector<8x256xf32>
    tpu.vector_store %arg6[%c0_10, %c0_11], %9 {strides = array<i32>} : memref<8x256xf32, #tpu.memory_space<vmem>>, vector<8x256xf32>,
    return
  }
  func.func @transform_0(%arg0: i32) -> (i32, i32) {
    %c0_i32 = arith.constant 0 : i32
    %c0_i32_0 = arith.constant 0 : i32
    return %arg0, %c0_i32 : i32, i32
  }
  func.func @transform_1(%arg0: i32) -> (i32, i32) {
    %c0_i32 = arith.constant 0 : i32
    %c0_i32_0 = arith.constant 0 : i32
    return %arg0, %c0_i32 : i32, i32
  }
  func.func @transform_2(%arg0: i32) -> (i32, i32) {
    %c0_i32 = arith.constant 0 : i32
    %c0_i32_0 = arith.constant 0 : i32
    %c0_i32_1 = arith.constant 0 : i32
    return %c0_i32, %c0_i32_0 : i32, i32
  }
  func.func @transform_3(%arg0: i32) -> (i32, i32) {
    %c0_i32 = arith.constant 0 : i32
    %c0_i32_0 = arith.constant 0 : i32
    %c0_i32_1 = arith.constant 0 : i32
    return %c0_i32, %c0_i32_0 : i32, i32
  }
  func.func @transform_4(%arg0: i32) -> (i32, i32) {
    %c0_i32 = arith.constant 0 : i32
    %c0_i32_0 = arith.constant 0 : i32
    %c0_i32_1 = arith.constant 0 : i32
    return %c0_i32, %c0_i32_0 : i32, i32
  }
  func.func @transform_5(%arg0: i32) -> (i32, i32) {
    %c0_i32 = arith.constant 0 : i32
    %c0_i32_0 = arith.constant 0 : i32
    return %c0_i32, %arg0 : i32, i32
  }
}

</mosaic_0001>

<llo_original>
// kernel: controller_forward.1
$region0: #{controller_forward.1}
  #allocation0 [shape = 'u32[]', space=smem, size = 0x4, offset = 0x4, fixed_abs, tag = 'smem constant byte address 0x4 - core index']
  #allocation1 [shape = 'u32[144,128]{1,0:T(1,128)}', space=vmem, size = 0x12000, scoped, tag = 'internal scratch']
  %s0 = inlined_call_operand.vmem [shape: f32[256,32], index: 0, kind: input, shape index: {}]
  %s1 = inlined_call_operand.vmem [shape: f32[256,64], index: 1, kind: input, shape index: {}]
  %s2 = inlined_call_operand.vmem [shape: f32[8,32], index: 2, kind: input, shape index: {}]
  %s3 = inlined_call_operand.vmem [shape: f32[8,64], index: 3, kind: input, shape index: {}]
  %s4 = inlined_call_operand.vmem [shape: f32[8,1], index: 4, kind: input, shape index: {}]
  %s5 = inlined_call_operand.hbm [shape: f32[8,256], index: 5, kind: output, shape index: {}]
  %s6 = sld [smem:[#allocation0]]
  $region30: #{controller_forward.1} parent=0
    _
  %s8 = ssub.s32 1, %s6
  %s9 = scalar_select 0, %s8, %s6
  $region1: #{controller_forward.1} parent=0
    #allocation2 [shape = 'u8[8192]{0}', space=vmem, size = 0x2000, scoped, tag = 'output window, operand 0, single buffered']
    #allocation3 [shape = 's32[1]{0}', space=sflag, size = 0x4, scoped, tag = 'scoped memory for controller_forward.1']
    %10 = vsyncpa [#allocation3], 0
    // Predicated region
    $region2: #{controller_forward.1} parent=1 // pred_check
      _
    $region3: #{controller_forward.1} parent=1 // pred_check_branch
      %12 = sbr.rel (0) target = $region5
    $region4: #{controller_forward.1} parent=1 // pred_region
      _
    $region5: #{controller_forward.1} parent=1 // pred_fallthru
      _
    // Predicated region
    $region6: #{controller_forward.1} parent=1 // pred_check
      _
    $region7: #{controller_forward.1} parent=1 // pred_check_branch
      %14 = sbr.rel (0) target = $region9
    $region8: #{controller_forward.1} parent=1 // pred_region
      _
    $region9: #{controller_forward.1} parent=1 // pred_fallthru
      _
    // Predicated region
    $region10: #{controller_forward.1} parent=1 // pred_check
      _
    $region11: #{controller_forward.1} parent=1 // pred_check_branch
      %16 = sbr.rel (0) target = $region13
    $region12: #{controller_forward.1} parent=1 // pred_region
      _
    $region13: #{controller_forward.1} parent=1 // pred_fallthru
      _
    // Predicated region
    $region14: #{controller_forward.1} parent=1 // pred_check
      _
    $region15: #{controller_forward.1} parent=1 // pred_check_branch
      %18 = sbr.rel (0) target = $region17
    $region16: #{controller_forward.1} parent=1 // pred_region
      _
    $region17: #{controller_forward.1} parent=1 // pred_fallthru
      _
    // Predicated region
    $region18: #{controller_forward.1} parent=1 // pred_check
      _
    $region19: #{controller_forward.1} parent=1 // pred_check_branch
      %20 = sbr.rel (0) target = $region21
    $region20: #{controller_forward.1} parent=1 // pred_region
      _
    $region21: #{controller_forward.1} parent=1 // pred_fallthru
      _
    %v21 = vld [vmem:[%s2] sm:$0xff]
    %v22 = vld [vmem:[%s0] sm:$0xff]
    %v23 = vld [vmem:[%s0 + $0x8] sm:$0xff]
    %v24 = vld [vmem:[%s0 + $0x10] sm:$0xff]
    %v25 = vld [vmem:[%s0 + $0x18] sm:$0xff]
    %v26 = vld [vmem:[%s0 + $0x20] sm:$0xff]
    %v27 = vld [vmem:[%s0 + $0x28] sm:$0xff]
    %v28 = vld [vmem:[%s0 + $0x30] sm:$0xff]
    %v29 = vld [vmem:[%s0 + $0x38] sm:$0xff]
    %v30 = vld [vmem:[%s0 + $0x40] sm:$0xff]
    %v31 = vld [vmem:[%s0 + $0x48] sm:$0xff]
    %v32 = vld [vmem:[%s0 + $0x50] sm:$0xff]
    %v33 = vld [vmem:[%s0 + $0x58] sm:$0xff]
    %v34 = vld [vmem:[%s0 + $0x60] sm:$0xff]
    %v35 = vld [vmem:[%s0 + $0x68] sm:$0xff]
    %v36 = vld [vmem:[%s0 + $0x70] sm:$0xff]
    %v37 = vld [vmem:[%s0 + $0x78] sm:$0xff]
    %v38 = vld [vmem:[%s0 + $0x80] sm:$0xff]
    %v39 = vld [vmem:[%s0 + $0x88] sm:$0xff]
    %v40 = vld [vmem:[%s0 + $0x90] sm:$0xff]
    %v41 = vld [vmem:[%s0 + $0x98] sm:$0xff]
    %v42 = vld [vmem:[%s0 + $0xa0] sm:$0xff]
    %v43 = vld [vmem:[%s0 + $0xa8] sm:$0xff]
    %v44 = vld [vmem:[%s0 + $0xb0] sm:$0xff]
    %v45 = vld [vmem:[%s0 + $0xb8] sm:$0xff]
    %v46 = vld [vmem:[%s0 + $0xc0] sm:$0xff]
    %v47 = vld [vmem:[%s0 + $0xc8] sm:$0xff]
    %v48 = vld [vmem:[%s0 + $0xd0] sm:$0xff]
    %v49 = vld [vmem:[%s0 + $0xd8] sm:$0xff]
    %v50 = vld [vmem:[%s0 + $0xe0] sm:$0xff]
    %v51 = vld [vmem:[%s0 + $0xe8] sm:$0xff]
    %v52 = vld [vmem:[%s0 + $0xf0] sm:$0xff]
    %v53 = vld [vmem:[%s0 + $0xf8] sm:$0xff]
    %v54 = vld [vmem:[%s3] sm:$0xff]
    %v55 = vld [vmem:[%s1] sm:$0xff]
    %v56 = vld [vmem:[%s1 + $0x8] sm:$0xff]
    %v57 = vld [vmem:[%s1 + $0x10] sm:$0xff]
    %v58 = vld [vmem:[%s1 + $0x18] sm:$0xff]
    %v59 = vld [vmem:[%s1 + $0x20] sm:$0xff]
    %v60 = vld [vmem:[%s1 + $0x28] sm:$0xff]
    %v61 = vld [vmem:[%s1 + $0x30] sm:$0xff]
    %v62 = vld [vmem:[%s1 + $0x38] sm:$0xff]
    %v63 = vld [vmem:[%s1 + $0x40] sm:$0xff]
    %v64 = vld [vmem:[%s1 + $0x48] sm:$0xff]
    %v65 = vld [vmem:[%s1 + $0x50] sm:$0xff]
    %v66 = vld [vmem:[%s1 + $0x58] sm:$0xff]
    %v67 = vld [vmem:[%s1 + $0x60] sm:$0xff]
    %v68 = vld [vmem:[%s1 + $0x68] sm:$0xff]
    %v69 = vld [vmem:[%s1 + $0x70] sm:$0xff]
    %v70 = vld [vmem:[%s1 + $0x78] sm:$0xff]
    %v71 = vld [vmem:[%s1 + $0x80] sm:$0xff]
    %v72 = vld [vmem:[%s1 + $0x88] sm:$0xff]
    %v73 = vld [vmem:[%s1 + $0x90] sm:$0xff]
    %v74 = vld [vmem:[%s1 + $0x98] sm:$0xff]
    %v75 = vld [vmem:[%s1 + $0xa0] sm:$0xff]
    %v76 = vld [vmem:[%s1 + $0xa8] sm:$0xff]
    %v77 = vld [vmem:[%s1 + $0xb0] sm:$0xff]
    %v78 = vld [vmem:[%s1 + $0xb8] sm:$0xff]
    %v79 = vld [vmem:[%s1 + $0xc0] sm:$0xff]
    %v80 = vld [vmem:[%s1 + $0xc8] sm:$0xff]
    %v81 = vld [vmem:[%s1 + $0xd0] sm:$0xff]
    %v82 = vld [vmem:[%s1 + $0xd8] sm:$0xff]
    %v83 = vld [vmem:[%s1 + $0xe0] sm:$0xff]
    %v84 = vld [vmem:[%s1 + $0xe8] sm:$0xff]
    %v85 = vld [vmem:[%s1 + $0xf0] sm:$0xff]
    %v86 = vld [vmem:[%s1 + $0xf8] sm:$0xff]
    %vm87 = vcmask 523264
    %v89 = vsel %vm87, %v54, 0
    %v92 = vsel %vm87, %v55, 0
    %v95 = vsel %vm87, %v56, 0
    %v98 = vsel %vm87, %v57, 0
    %v101 = vsel %vm87, %v58, 0
    %v104 = vsel %vm87, %v59, 0
    %v107 = vsel %vm87, %v60, 0
    %v110 = vsel %vm87, %v61, 0
    %v113 = vsel %vm87, %v62, 0
    %v116 = vsel %vm87, %v63, 0
    %v119 = vsel %vm87, %v64, 0
    %v122 = vsel %vm87, %v65, 0
    %v125 = vsel %vm87, %v66, 0
    %v128 = vsel %vm87, %v67, 0
    %v131 = vsel %vm87, %v68, 0
    %v134 = vsel %vm87, %v69, 0
    %v137 = vsel %vm87, %v70, 0
    %v140 = vsel %vm87, %v71, 0
    %v143 = vsel %vm87, %v72, 0
    %v146 = vsel %vm87, %v73, 0
    %v149 = vsel %vm87, %v74, 0
    %v152 = vsel %vm87, %v75, 0
    %v155 = vsel %vm87, %v76, 0
    %v158 = vsel %vm87, %v77, 0
    %v161 = vsel %vm87, %v78, 0
    %v164 = vsel %vm87, %v79, 0
    %v167 = vsel %vm87, %v80, 0
    %v170 = vsel %vm87, %v81, 0
    %v173 = vsel %vm87, %v82, 0
    %v176 = vsel %vm87, %v83, 0
    %v179 = vsel %vm87, %v84, 0
    %v182 = vsel %vm87, %v85, 0
    %v185 = vsel %vm87, %v86, 0
    %187 = vmatprep.subr.mxu0 0.0
    %188 = vmatpush1.xpose.msra.mxu0 %v92
    %189 = vmatprep.subr.mxu0 0.0
    %190 = vmatpush1.xpose.msra.mxu0 %v95
    %191 = vmatprep.subr.mxu0 0.0
    %192 = vmatpush1.xpose.msra.mxu0 %v98
    %193 = vmatprep.subr.mxu0 0.0
    %194 = vmatpush1.xpose.msra.mxu0 %v101
    %195 = vmatprep.subr.mxu0 0.0
    %196 = vmatpush1.xpose.msra.mxu0 %v104
    %197 = vmatprep.subr.mxu0 0.0
    %198 = vmatpush1.xpose.msra.mxu0 %v107
    %199 = vmatprep.subr.mxu0 0.0
    %200 = vmatpush1.xpose.msra.mxu0 %v110
    %201 = vmatprep.subr.mxu0 0.0
    %202 = vmatpush1.xpose.msra.mxu0 %v113
    %203 = vmatprep.subr.mxu0 0.0
    %204 = vmatpush1.xpose.msra.mxu0 %v116
    %205 = vmatprep.subr.mxu0 0.0
    %206 = vmatpush1.xpose.msra.mxu0 %v119
    %207 = vmatprep.subr.mxu0 0.0
    %208 = vmatpush1.xpose.msra.mxu0 %v122
    %209 = vmatprep.subr.mxu0 0.0
    %210 = vmatpush1.xpose.msra.mxu0 %v125
    %211 = vmatprep.subr.mxu0 0.0
    %212 = vmatpush1.xpose.msra.mxu0 %v128
    %213 = vmatprep.subr.mxu0 0.0
    %214 = vmatpush1.xpose.msra.mxu0 %v131
    %215 = vmatprep.subr.mxu0 0.0
    %216 = vmatpush1.xpose.msra.mxu0 %v134
    %217 = vmatprep.subr.mxu0 0.0
    %218 = vmatpush1.xpose.msra.mxu0 %v137
    %219 = vmatprep.subr.mxu0 0.0
    %220 = vmatpush1.xpose.msra.mxu0 %v140
    %221 = vmatprep.subr.mxu0 0.0
    %222 = vmatpush1.xpose.msra.mxu0 %v143
    %223 = vmatprep.subr.mxu0 0.0
    %224 = vmatpush1.xpose.msra.mxu0 %v146
    %225 = vmatprep.subr.mxu0 0.0
    %226 = vmatpush1.xpose.msra.mxu0 %v149
    %227 = vmatprep.subr.mxu0 0.0
    %228 = vmatpush1.xpose.msra.mxu0 %v152
    %229 = vmatprep.subr.mxu0 0.0
    %230 = vmatpush1.xpose.msra.mxu0 %v155
    %231 = vmatprep.subr.mxu0 0.0
    %232 = vmatpush1.xpose.msra.mxu0 %v158
    %233 = vmatprep.subr.mxu0 0.0
    %234 = vmatpush1.xpose.msra.mxu0 %v161
    %235 = vmatprep.subr.mxu0 0.0
    %236 = vmatpush1.xpose.msra.mxu0 %v164
    %237 = vmatprep.subr.mxu0 0.0
    %238 = vmatpush1.xpose.msra.mxu0 %v167
    %239 = vmatprep.subr.mxu0 0.0
    %240 = vmatpush1.xpose.msra.mxu0 %v170
    %241 = vmatprep.subr.mxu0 0.0
    %242 = vmatpush1.xpose.msra.mxu0 %v173
    %243 = vmatprep.subr.mxu0 0.0
    %244 = vmatpush1.xpose.msra.mxu0 %v176
    %245 = vmatprep.subr.mxu0 0.0
    %246 = vmatpush1.xpose.msra.mxu0 %v179
    %247 = vmatprep.subr.mxu0 0.0
    %248 = vmatpush1.xpose.msra.mxu0 %v182
    %249 = vmatprep.subr.mxu0 0.0
    %250 = vmatpush1.xpose.msra.mxu0 %v185
    %251 = vmatprep.mubr.f32.mxu0 0.0
    %252 = vmatmul.mubr.f32.gmra.mrb[0].mxu0 %v89
    %v253 = vpop.f32.mrb[0].mxu0
    %v254 = vadd.f32 0.0, %v253
    %v255 = vpop.f32.mrb[0].mxu0
    %v256 = vadd.f32 0.0, %v255
    %257 = vdwg.mxu0
    %vm258 = vcmask 261120
    %v260 = vsel %vm258, %v21, 0
    %v263 = vsel %vm258, %v22, 0
    %v266 = vsel %vm258, %v23, 0
    %v269 = vsel %vm258, %v24, 0
    %v272 = vsel %vm258, %v25, 0
    %v275 = vsel %vm258, %v26, 0
    %v278 = vsel %vm258, %v27, 0
    %v281 = vsel %vm258, %v28, 0
    %v284 = vsel %vm258, %v29, 0
    %v287 = vsel %vm258, %v30, 0
    %v290 = vsel %vm258, %v31, 0
    %v293 = vsel %vm258, %v32, 0
    %v296 = vsel %vm258, %v33, 0
    %v299 = vsel %vm258, %v34, 0
    %v302 = vsel %vm258, %v35, 0
    %v305 = vsel %vm258, %v36, 0
    %v308 = vsel %vm258, %v37, 0
    %v311 = vsel %vm258, %v38, 0
    %v314 = vsel %vm258, %v39, 0
    %v317 = vsel %vm258, %v40, 0
    %v320 = vsel %vm258, %v41, 0
    %v323 = vsel %vm258, %v42, 0
    %v326 = vsel %vm258, %v43, 0
    %v329 = vsel %vm258, %v44, 0
    %v332 = vsel %vm258, %v45, 0
    %v335 = vsel %vm258, %v46, 0
    %v338 = vsel %vm258, %v47, 0
    %v341 = vsel %vm258, %v48, 0
    %v344 = vsel %vm258, %v49, 0
    %v347 = vsel %vm258, %v50, 0
    %v350 = vsel %vm258, %v51, 0
    %v353 = vsel %vm258, %v52, 0
    %v356 = vsel %vm258, %v53, 0
    %358 = vmatprep.subr.mxu0 0.0
    %359 = vmatpush1.xpose.msra.mxu0 %v263
    %360 = vmatprep.subr.mxu0 0.0
    %361 = vmatpush1.xpose.msra.mxu0 %v266
    %362 = vmatprep.subr.mxu0 0.0
    %363 = vmatpush1.xpose.msra.mxu0 %v269
    %364 = vmatprep.subr.mxu0 0.0
    %365 = vmatpush1.xpose.msra.mxu0 %v272
    %366 = vmatprep.subr.mxu0 0.0
    %367 = vmatpush1.xpose.msra.mxu0 %v275
    %368 = vmatprep.subr.mxu0 0.0
    %369 = vmatpush1.xpose.msra.mxu0 %v278
    %370 = vmatprep.subr.mxu0 0.0
    %371 = vmatpush1.xpose.msra.mxu0 %v281
    %372 = vmatprep.subr.mxu0 0.0
    %373 = vmatpush1.xpose.msra.mxu0 %v284
    %374 = vmatprep.subr.mxu0 0.0
    %375 = vmatpush1.xpose.msra.mxu0 %v287
    %376 = vmatprep.subr.mxu0 0.0
    %377 = vmatpush1.xpose.msra.mxu0 %v290
    %378 = vmatprep.subr.mxu0 0.0
    %379 = vmatpush1.xpose.msra.mxu0 %v293
    %380 = vmatprep.subr.mxu0 0.0
    %381 = vmatpush1.xpose.msra.mxu0 %v296
    %382 = vmatprep.subr.mxu0 0.0
    %383 = vmatpush1.xpose.msra.mxu0 %v299
    %384 = vmatprep.subr.mxu0 0.0
    %385 = vmatpush1.xpose.msra.mxu0 %v302
    %386 = vmatprep.subr.mxu0 0.0
    %387 = vmatpush1.xpose.msra.mxu0 %v305
    %388 = vmatprep.subr.mxu0 0.0
    %389 = vmatpush1.xpose.msra.mxu0 %v308
    %390 = vmatprep.subr.mxu0 0.0
    %391 = vmatpush1.xpose.msra.mxu0 %v311
    %392 = vmatprep.subr.mxu0 0.0
    %393 = vmatpush1.xpose.msra.mxu0 %v314
    %394 = vmatprep.subr.mxu0 0.0
    %395 = vmatpush1.xpose.msra.mxu0 %v317
    %396 = vmatprep.subr.mxu0 0.0
    %397 = vmatpush1.xpose.msra.mxu0 %v320
    %398 = vmatprep.subr.mxu0 0.0
    %399 = vmatpush1.xpose.msra.mxu0 %v323
    %400 = vmatprep.subr.mxu0 0.0
    %401 = vmatpush1.xpose.msra.mxu0 %v326
    %402 = vmatprep.subr.mxu0 0.0
    %403 = vmatpush1.xpose.msra.mxu0 %v329
    %404 = vmatprep.subr.mxu0 0.0
    %405 = vmatpush1.xpose.msra.mxu0 %v332
    %406 = vmatprep.subr.mxu0 0.0
    %407 = vmatpush1.xpose.msra.mxu0 %v335
    %408 = vmatprep.subr.mxu0 0.0
    %409 = vmatpush1.xpose.msra.mxu0 %v338
    %410 = vmatprep.subr.mxu0 0.0
    %411 = vmatpush1.xpose.msra.mxu0 %v341
    %412 = vmatprep.subr.mxu0 0.0
    %413 = vmatpush1.xpose.msra.mxu0 %v344
    %414 = vmatprep.subr.mxu0 0.0
    %415 = vmatpush1.xpose.msra.mxu0 %v347
    %416 = vmatprep.subr.mxu0 0.0
    %417 = vmatpush1.xpose.msra.mxu0 %v350
    %418 = vmatprep.subr.mxu0 0.0
    %419 = vmatpush1.xpose.msra.mxu0 %v353
    %420 = vmatprep.subr.mxu0 0.0
    %421 = vmatpush1.xpose.msra.mxu0 %v356
    %422 = vmatprep.mubr.f32.mxu0 0.0
    %423 = vmatmul.mubr.f32.gmra.mrb[0].mxu0 %v260
    %v424 = vpop.f32.mrb[0].mxu0
    %v425 = vadd.f32 %v254, %v424
    %v426 = vpop.f32.mrb[0].mxu0
    %v427 = vadd.f32 %v256, %v426
    %428 = vdwg.mxu0
    %v429 = vld [vmem:[%s4] sm:$0xff]
    %431 = vset.pattern.permute.xlu0 0
    %432 = vperm.xlu0 %431, %v429
    %v433 = vpop.permute.xlu0 %432
    %v435 = vadd.f32 %v425, %v433
    %v436 = vadd.f32 %v427, %v433
    %437 = vst [vmem:[#allocation2] sm:$0xff] %v435
    %438 = vst [vmem:[#allocation2 + $0x8] sm:$0xff] %v436
    // Predicated region
    $region22: #{controller_forward.1} parent=1 // pred_check
      _
    $region23: #{controller_forward.1} parent=1 // pred_check_branch
      %440 = sbr.rel (0) target = $region25
    $region24: #{controller_forward.1} parent=1 // pred_region
      %s442 = ssub.s32 256, 256
      %443 = vsyncadd [#allocation3], %s442
      %s445 = sshll.u32 [#allocation2], 4
      %s446 = int_to_ptr.vmem [resolvable:$true] %s445
      %448 = dma.vmem_to_hbm [thread:$0]  %s446, 256, %s5, [#allocation3]
    $region25: #{controller_forward.1} parent=1 // pred_fallthru
      _
    // Predicated region
    $region26: #{controller_forward.1} parent=1 // pred_check
      _
    $region27: #{controller_forward.1} parent=1 // pred_check_branch
      %450 = sbr.rel (0) target = $region29
    $region28: #{controller_forward.1} parent=1 // pred_region
      %451 = dma.done [#allocation3], 256
    $region29: #{controller_forward.1} parent=1 // pred_fallthru
      _
    %452 = vsyncpa [#allocation3], 1

</llo_original>
